<compile_context>
chip_gen: v6e
topology: v6e:2x2x1
jax: 0.10.0
libtpu: 0.0.40
codegen_flags: <defaults>
</compile_context>

<pallas_src>
import functools

import jax
import jax.numpy as jnp
from jax.experimental import pallas as pl
from jax.experimental.pallas import tpu as pltpu


def _cdiv(a, b):
    return (a + b - 1) // b


def _physical_vmem_bytes():
    """Per-core VMEM capacity, with a conservative fallback (v7x = 64 MiB)."""
    try:
        return int(pltpu.get_tpu_info().vmem_capacity_bytes)
    except Exception:
        return 64 * 1024 * 1024


def _tensorcores_per_chip():
    """2 for megacore parts (v4 / v5p / v7x), 1 for single-TC chips (v5e / v6e)."""
    try:
        kind = jax.devices()[0].device_kind.lower()
    except Exception:
        return 1
    if "v7" in kind or "v4" in kind or "v5p" in kind:
        return 2
    return 1


def _sigmoid_pow(sig, gamma):
    """sigmoid(x)**gamma as a multiply chain for small integer gamma."""
    g = float(gamma)
    if g.is_integer() and 0 <= g <= 8:
        gi = int(g)
        if gi == 0:
            return jnp.ones_like(sig)
        out = sig
        for _ in range(gi - 1):
            out = out * sig
        return out
    return sig ** g


def _vfl_kernel(pred_ref, gt_ref, label_ref, out_ref, *,
                alpha, gamma, tm, n_blocks, n_blocks_total, valid_rows,
                has_partial_last, has_dup):
    p = pl.program_id(0)
    i = pl.program_id(1)

    # Zero the per-partition resident accumulator on the first reduction step.
    @pl.when(i == 0)
    def _():
        out_ref[...] = jnp.zeros_like(out_ref)

    # Mirror `autocast(enabled=False)` / `.float()`: all math in f32 regardless
    # of the (possibly bf16) storage dtype of the streamed inputs.
    x = pred_ref[...].astype(jnp.float32)
    y = gt_ref[...].astype(jnp.float32)
    lbl = label_ref[...].astype(jnp.float32)

    # One shared EUP exp: e = exp(-|x|) feeds both sigmoid and the stable BCE.
    e = jnp.exp(-jnp.abs(x))
    inv_1pe = pl.reciprocal(1.0 + e, approx=False)   # exact; kernel is HBM-bound
    sig = jnp.where(x >= 0, inv_1pe, e * inv_1pe)    # == sigmoid(x)

    weight = alpha * _sigmoid_pow(sig, gamma) * (1.0 - lbl) + y * lbl

    # Numerically stable binary_cross_entropy_with_logits (reduction='none'):
    #   bce = max(x, 0) - x*y + log1p(exp(-|x|))
    bce = jnp.maximum(x, 0.0) - x * y + jnp.log1p(e)
    per_elem = bce * weight

    def _accumulate(vals):
        tile_sum = jnp.sum(vals, axis=0, keepdims=True)        # XLU sublane reduce
        out_ref[...] = out_ref[...] + tile_sum.reshape(1, 1, -1)

    blk = p * n_blocks + i            # logical row-block index

    if has_partial_last:
        last = n_blocks_total - 1

        @pl.when(blk < last)
        def _():
            _accumulate(per_elem)

        @pl.when(blk == last)
        def _():
            # Only the true last block pays for the tail-row mask; rows past the
            # end of the array (garbage in the partial tile) contribute exactly 0.
            row_ids = last * tm + jax.lax.broadcasted_iota(jnp.int32, (tm, 1), 0)
            _accumulate(jnp.where(row_ids < valid_rows, per_elem, 0.0))
        # blk > last are clamped duplicate blocks: skip the accumulate entirely.
    elif has_dup:
        @pl.when(blk < n_blocks_total)
        def _():
            _accumulate(per_elem)
    else:
        _accumulate(per_elem)


def _vfl_elementwise_ref(pred, gt, label, alpha, gamma):
    """Plain-JAX per-element loss (used for the ragged tail and as reference)."""
    x = pred.astype(jnp.float32)
    y = gt.astype(jnp.float32)
    lbl = label.astype(jnp.float32)
    weight = alpha * jax.nn.sigmoid(x) ** gamma * (1.0 - lbl) + y * lbl
    bce = jnp.maximum(x, 0.0) - x * y + jnp.log1p(jnp.exp(-jnp.abs(x)))
    return bce * weight


def varifocal_loss(pred_score, gt_score, label, alpha=0.75, gamma=2.0,
                   *, block_rows=4096, n_split=None):
    assert pred_score.shape == gt_score.shape == label.shape
    assert pred_score.ndim == 3, "expected (batch, anchors, classes)"
    B, N, C = pred_score.shape
    total = B * N * C

    lanes = 128
    bulk = (total // lanes) * lanes
    tail = total - bulk

    pred_f = pred_score.reshape(-1)
    gt_f = gt_score.reshape(-1)
    lbl_f = label.reshape(-1)

    tail_sum = jnp.float32(0.0)
    if tail:
        # Rare ragged tail (< 128 elements): plain JAX keeps the kernel fully
        # lane-dense instead of running the whole array lane-padded.
        tail_sum = jnp.sum(_vfl_elementwise_ref(
            pred_f[bulk:], gt_f[bulk:], lbl_f[bulk:], alpha, gamma))
    if bulk == 0:
        return tail_sum / jnp.float32(N)

    rows = bulk // lanes

    def as_slab(flat):
        body = flat[:bulk] if tail else flat
        return body.reshape(rows, lanes)

    pred2, gt2, lbl2 = as_slab(pred_f), as_slab(gt_f), as_slab(lbl_f)

    # --- row-block size: generation-aware VMEM budget ------------------------
    bytes_per_row = lanes * (pred2.dtype.itemsize + gt2.dtype.itemsize +
                             lbl2.dtype.itemsize)
    phys_vmem = _physical_vmem_bytes()
    # Budget for the 3 double-buffered input streams: <= half of physical VMEM,
    # capped at 32 MiB so it also fits v7x's 64 MiB physical with headroom.
    in_budget = min(phys_vmem // 2, 32 * 1024 * 1024)
    tm = max(8, min(int(block_rows), (in_budget // (2 * bytes_per_row)) // 8 * 8))
    if rows >= 8:
        tm = min(tm, (rows // 8) * 8)
    else:
        tm = rows                      # single block == full (tiny) row extent

    n_blocks_total = _cdiv(rows, tm)

    # --- megacore split: one partition per TensorCore ------------------------
    n_par = _tensorcores_per_chip() if n_split is None else max(1, int(n_split))
    n_par = min(n_par, n_blocks_total)
    n_blocks = _cdiv(n_blocks_total, n_par)

    has_partial_last = (n_blocks_total * tm) != rows
    has_dup = (n_par * n_blocks) != n_blocks_total

    def in_index_map(p, i):
        # Clamp so duplicate tail blocks (skipped inside the kernel) never
        # index past the end of the array.
        return (jnp.minimum(p * n_blocks + i, n_blocks_total - 1), 0)

    kernel = functools.partial(
        _vfl_kernel, alpha=float(alpha), gamma=float(gamma), tm=tm,
        n_blocks=n_blocks, n_blocks_total=n_blocks_total, valid_rows=rows,
        has_partial_last=has_partial_last, has_dup=has_dup)

    in_spec = pl.BlockSpec((tm, lanes), in_index_map)
    # Double-buffered inputs + generous headroom; set explicitly so large tiles
    # also compile under v5e's 16 MiB scoped-VMEM default.
    vmem_limit = int(min(phys_vmem, 2 * bytes_per_row * tm + 16 * 1024 * 1024))

    partials = pl.pallas_call(
        kernel,
        out_shape=jax.ShapeDtypeStruct((n_par, 1, lanes), jnp.float32),
        grid=(n_par, n_blocks),
        in_specs=[in_spec, in_spec, in_spec],
        out_specs=pl.BlockSpec((1, 1, lanes), lambda p, i: (p, 0, 0)),
        compiler_params=pltpu.CompilerParams(
            dimension_semantics=("parallel", "arbitrary"),
            vmem_limit_bytes=vmem_limit),
    )(pred2, gt2, lbl2)

    # (bce * weight).mean(1).sum() over (B, N, C) == global_sum / N ; the tiny
    # cross-lane / cross-partition reduce and the /N division stay in JAX.
    # TODO(synk): forward-only; training use needs a custom_vjp backward kernel.
    return (jnp.sum(partials) + tail_sum) / jnp.float32(N)


def _reference_loss(pred_score, gt_score, label, alpha=0.75, gamma=2.0):
    per_elem = _vfl_elementwise_ref(pred_score, gt_score, label, alpha, gamma)
    return per_elem.mean(axis=1).sum()


if __name__ == "__main__":
    key = jax.random.PRNGKey(0)
    k1, k2, k3 = jax.random.split(key, 3)

    cases = [
        ((2, 8, 128), jnp.float32),    # lane-aligned, single block
        ((2, 8, 80), jnp.float32),     # C=80, total%128==0 -> partial last row block
        ((2, 7, 80), jnp.float32),     # total%128!=0 -> ragged-tail (plain JAX) path
        ((2, 8, 128), jnp.bfloat16),   # bf16 streaming contract (cast in-kernel)
    ]
    for (B, N, C), dt in cases:
        pred_score = (jax.random.normal(k1, (B, N, C), dtype=jnp.float32) * 2.0).astype(dt)
        gt_score = jax.random.uniform(k2, (B, N, C), dtype=jnp.float32).astype(dt)
        label = (jax.random.uniform(k3, (B, N, C)) > 0.9).astype(dt)

        loss = jax.block_until_ready(varifocal_loss(pred_score, gt_score, label))
        ref = _reference_loss(pred_score, gt_score, label)
        assert jnp.allclose(loss, ref, rtol=1e-4, atol=1e-4), ((B, N, C), dt, loss, ref)

    print("KERNEL_OK")
</pallas_src>

<mosaic_0001>
module attributes {stable_mosaic.version = 11 : i64} {
  func.func @_vfl_kernel(%arg0: i32, %arg1: i32, %arg2: memref<16x128xf32, #tpu.memory_space<vmem>>, %arg3: memref<16x128xf32, #tpu.memory_space<vmem>>, %arg4: memref<16x128xf32, #tpu.memory_space<vmem>>, %arg5: memref<1x1x128xf32, #tpu.memory_space<vmem>>) attributes {dimension_semantics = [#tpu.dimension_semantics<parallel>, #tpu.dimension_semantics<arbitrary>], iteration_bounds = array<i64: 1, 1>, scalar_prefetch = 0 : i64, scratch_operands = 0 : i64, tpu.core_type = #tpu.core_type<tc>, window_params = [{transform_indices = @transform_0, window_bounds = array<i64: 16, 128>}, {transform_indices = @transform_1, window_bounds = array<i64: 16, 128>}, {transform_indices = @transform_2, window_bounds = array<i64: 16, 128>}, {transform_indices = @transform_3, window_bounds = array<i64: 1, 1, 128>}]} {
    %c0_i32 = arith.constant 0 : i32
    %0 = arith.cmpi eq, %arg1, %c0_i32 : i32
    %1 = arith.extui %0 : i1 to i32
    %c0_i32_0 = arith.constant 0 : i32
    %2 = arith.cmpi ne, %1, %c0_i32_0 : i32
    scf.if %2 {
      %cst_18 = arith.constant 0.000000e+00 : f32
      %38 = vector.broadcast %cst_18 : f32 to vector<1x1x128xf32>
      %c0_19 = arith.constant 0 : index
      %c0_20 = arith.constant 0 : index
      %c0_21 = arith.constant 0 : index
      %39 = vector.load %arg5[%c0_19, %c0_20, %c0_21] : memref<1x1x128xf32, #tpu.memory_space<vmem>>, vector<1x1x128xf32>
      tpu.vector_store %arg5[%c0_19, %c0_20, %c0_21], %38 {strides = array<i32>} : memref<1x1x128xf32, #tpu.memory_space<vmem>>, vector<1x1x128xf32>,
    } else {
    }
    %c0 = arith.constant 0 : index
    %c0_1 = arith.constant 0 : index
    %3 = vector.load %arg2[%c0, %c0_1] : memref<16x128xf32, #tpu.memory_space<vmem>>, vector<16x128xf32>
    %c0_2 = arith.constant 0 : index
    %c0_3 = arith.constant 0 : index
    %4 = vector.load %arg3[%c0_2, %c0_3] : memref<16x128xf32, #tpu.memory_space<vmem>>, vector<16x128xf32>
    %c0_4 = arith.constant 0 : index
    %c0_5 = arith.constant 0 : index
    %5 = vector.load %arg4[%c0_4, %c0_5] : memref<16x128xf32, #tpu.memory_space<vmem>>, vector<16x128xf32>
    %6 = math.absf %3 : vector<16x128xf32>
    %cst = arith.constant 0.000000e+00 : f32
    %7 = vector.broadcast %cst : f32 to vector<16x128xf32>
    %8 = arith.subf %7, %6 : vector<16x128xf32>
    %9 = math.exp %8 : vector<16x128xf32>
    %cst_6 = arith.constant 1.000000e+00 : f32
    %10 = vector.broadcast %cst_6 : f32 to vector<16x128xf32>
    %11 = arith.addf %10, %9 : vector<16x128xf32>
    %12 = tpu.reciprocal %11 : vector<16x128xf32> -> vector<16x128xf32>
    %cst_7 = arith.constant 0.000000e+00 : f32
    %13 = vector.broadcast %cst_7 : f32 to vector<16x128xf32>
    %14 = arith.cmpf oge, %3, %13 : vector<16x128xf32>
    %15 = arith.mulf %9, %12 : vector<16x128xf32>
    %16 = arith.select %14, %12, %15 : vector<16x128xi1>, vector<16x128xf32>
    %17 = arith.mulf %16, %16 : vector<16x128xf32>
    %cst_8 = arith.constant 7.500000e-01 : f32
    %18 = vector.broadcast %cst_8 : f32 to vector<16x128xf32>
    %19 = arith.mulf %18, %17 : vector<16x128xf32>
    %cst_9 = arith.constant 1.000000e+00 : f32
    %20 = vector.broadcast %cst_9 : f32 to vector<16x128xf32>
    %21 = arith.subf %20, %5 : vector<16x128xf32>
    %22 = arith.mulf %19, %21 : vector<16x128xf32>
    %23 = arith.mulf %4, %5 : vector<16x128xf32>
    %24 = arith.addf %22, %23 : vector<16x128xf32>
    %cst_10 = arith.constant 0.000000e+00 : f32
    %25 = vector.broadcast %cst_10 : f32 to vector<16x128xf32>
    %26 = arith.maximumf %3, %25 : vector<16x128xf32>
    %27 = arith.mulf %3, %4 : vector<16x128xf32>
    %28 = arith.subf %26, %27 : vector<16x128xf32>
    %29 = math.log1p %9 : vector<16x128xf32>
    %30 = arith.addf %28, %29 : vector<16x128xf32>
    %31 = arith.mulf %30, %24 : vector<16x128xf32>
    %cst_11 = arith.constant dense<0.000000e+00> : vector<128xf32>
    %32 = vector.multi_reduction <add>, %31, %cst_11 [0] : vector<16x128xf32> to vector<128xf32>
    %33 = vector.shape_cast %32 : vector<128xf32> to vector<1x128xf32>
    %c0_12 = arith.constant 0 : index
    %c0_13 = arith.constant 0 : index
    %c0_14 = arith.constant 0 : index
    %34 = vector.load %arg5[%c0_12, %c0_13, %c0_14] : memref<1x1x128xf32, #tpu.memory_space<vmem>>, vector<1x1x128xf32>
    %35 = vector.shape_cast %33 : vector<1x128xf32> to vector<1x1x128xf32>
    %36 = arith.addf %34, %35 : vector<1x1x128xf32>
    %c0_15 = arith.constant 0 : index
    %c0_16 = arith.constant 0 : index
    %c0_17 = arith.constant 0 : index
    %37 = vector.load %arg5[%c0_15, %c0_16, %c0_17] : memref<1x1x128xf32, #tpu.memory_space<vmem>>, vector<1x1x128xf32>
    tpu.vector_store %arg5[%c0_15, %c0_16, %c0_17], %36 {strides = array<i32>} : memref<1x1x128xf32, #tpu.memory_space<vmem>>, vector<1x1x128xf32>,
    return
  }
  func.func @transform_0(%arg0: i32, %arg1: i32) -> (i32, i32) {
    %c1_i32 = arith.constant 1 : i32
    %0 = arith.muli %arg0, %c1_i32 : i32
    %1 = arith.addi %0, %arg1 : i32
    %c0_i32 = arith.constant 0 : i32
    %2 = arith.minsi %1, %c0_i32 : i32
    %c0_i32_0 = arith.constant 0 : i32
    %c0_i32_1 = arith.constant 0 : i32
    return %2, %c0_i32_0 : i32, i32
  }
  func.func @transform_1(%arg0: i32, %arg1: i32) -> (i32, i32) {
    %c1_i32 = arith.constant 1 : i32
    %0 = arith.muli %arg0, %c1_i32 : i32
    %1 = arith.addi %0, %arg1 : i32
    %c0_i32 = arith.constant 0 : i32
    %2 = arith.minsi %1, %c0_i32 : i32
    %c0_i32_0 = arith.constant 0 : i32
    %c0_i32_1 = arith.constant 0 : i32
    return %2, %c0_i32_0 : i32, i32
  }
  func.func @transform_2(%arg0: i32, %arg1: i32) -> (i32, i32) {
    %c1_i32 = arith.constant 1 : i32
    %0 = arith.muli %arg0, %c1_i32 : i32
    %1 = arith.addi %0, %arg1 : i32
    %c0_i32 = arith.constant 0 : i32
    %2 = arith.minsi %1, %c0_i32 : i32
    %c0_i32_0 = arith.constant 0 : i32
    %c0_i32_1 = arith.constant 0 : i32
    return %2, %c0_i32_0 : i32, i32
  }
  func.func @transform_3(%arg0: i32, %arg1: i32) -> (i32, i32, i32) {
    %c0_i32 = arith.constant 0 : i32
    %c0_i32_0 = arith.constant 0 : i32
    %c0_i32_1 = arith.constant 0 : i32
    return %arg0, %c0_i32, %c0_i32_0 : i32, i32, i32
  }
}

</mosaic_0001>

<llo_original>
// kernel: tpu_custom_call.1
$region0: #{tpu_custom_call.1}
  #allocation0 [shape = 'u32[]', space=smem, size = 0x4, offset = 0x4, fixed_abs, tag = 'smem constant byte address 0x4 - core index']
  #allocation1 [shape = 'u32[144,128]{1,0:T(1,128)}', space=vmem, size = 0x12000, scoped, tag = 'internal scratch']
  %s0 = inlined_call_operand.hbm [shape: f32[16,128], index: 0, kind: input, shape index: {}]
  %s1 = inlined_call_operand.hbm [shape: f32[16,128], index: 1, kind: input, shape index: {}]
  %s2 = inlined_call_operand.hbm [shape: f32[16,128], index: 2, kind: input, shape index: {}]
  %s3 = inlined_call_operand.hbm [shape: f32[1,1,128], index: 3, kind: output, shape index: {}]
  %s4 = sld [smem:[#allocation0]]
  $region38: #{tpu_custom_call.1} parent=0
    _
  %s6 = ssub.s32 1, %s4
  %s7 = scalar_select 0, %s6, %s4
  $region1: #{tpu_custom_call.1} parent=0
    #allocation2 [shape = 'u8[8192]{0}', space=vmem, size = 0x2000, scoped, tag = 'input window, operand 0, single buffered']
    #allocation3 [shape = 's32[1]{0}', space=sflag, size = 0x4, scoped, tag = 'scoped memory for tpu_custom_call.1']
    #allocation4 [shape = 's32[1]{0}', space=sflag, size = 0x4, scoped, tag = 'scoped memory for tpu_custom_call.1']
    #allocation5 [shape = 'u8[8192]{0}', space=vmem, size = 0x2000, scoped, tag = 'input window, operand 1, single buffered']
    #allocation6 [shape = 's32[1]{0}', space=sflag, size = 0x4, scoped, tag = 'scoped memory for tpu_custom_call.1']
    #allocation7 [shape = 'u8[8192]{0}', space=vmem, size = 0x2000, scoped, tag = 'input window, operand 2, single buffered']
    #allocation8 [shape = 'u8[512]{0}', space=vmem, size = 0x400, scoped, tag = 'output window, operand 0, single buffered']
    %8 = vsyncpa [#allocation3], 0
    %9 = vsyncpa [#allocation6], 0
    %10 = vsyncpa [#allocation4], 0
    // Predicated region
    $region2: #{tpu_custom_call.1} parent=1 // pred_check
      _
    $region3: #{tpu_custom_call.1} parent=1 // pred_check_branch
      %12 = sbr.rel (0) target = $region5
    $region4: #{tpu_custom_call.1} parent=1 // pred_region
      %s13 = sadd.s32 0, 0
      %p14 = scmp.lt.s32.totalorder %s13, 0
      %s15 = scalar_select %p14, %s13, 0
      %s16 = smul.u32 2, %s15
      %s18 = ssub.s32 256, 256
      %19 = vsyncadd [#allocation3], %s18
      %s20 = smul.addr %s16, 128
      %s21 = scalar_lea.hbm %s0, %s20
      %s22 = sshll.u32 [#allocation2], 4
      %s23 = int_to_ptr.vmem [resolvable:$true] %s22
      %28 = dma.hbm_to_vmem [thread:$0]  %s21, 256, %s23, [#allocation3], 128, 128, 8
    $region5: #{tpu_custom_call.1} parent=1 // pred_fallthru
      _
    // Predicated region
    $region6: #{tpu_custom_call.1} parent=1 // pred_check
      _
    $region7: #{tpu_custom_call.1} parent=1 // pred_check_branch
      %30 = sbr.rel (0) target = $region9
    $region8: #{tpu_custom_call.1} parent=1 // pred_region
      %s31 = sadd.s32 0, 0
      %p32 = scmp.lt.s32.totalorder %s31, 0
      %s33 = scalar_select %p32, %s31, 0
      %s34 = smul.u32 2, %s33
      %s36 = ssub.s32 256, 256
      %37 = vsyncadd [#allocation6], %s36
      %s38 = smul.addr %s34, 128
      %s39 = scalar_lea.hbm %s1, %s38
      %s40 = sshll.u32 [#allocation5], 4
      %s41 = int_to_ptr.vmem [resolvable:$true] %s40
      %46 = dma.hbm_to_vmem [thread:$0]  %s39, 256, %s41, [#allocation6], 128, 128, 8
    $region9: #{tpu_custom_call.1} parent=1 // pred_fallthru
      _
    // Predicated region
    $region10: #{tpu_custom_call.1} parent=1 // pred_check
      _
    $region11: #{tpu_custom_call.1} parent=1 // pred_check_branch
      %48 = sbr.rel (0) target = $region13
    $region12: #{tpu_custom_call.1} parent=1 // pred_region
      %s49 = sadd.s32 0, 0
      %p50 = scmp.lt.s32.totalorder %s49, 0
      %s51 = scalar_select %p50, %s49, 0
      %s52 = smul.u32 2, %s51
      %s54 = ssub.s32 256, 256
      %55 = vsyncadd [#allocation6], %s54
      %s56 = smul.addr %s52, 128
      %s57 = scalar_lea.hbm %s2, %s56
      %s58 = sshll.u32 [#allocation7], 4
      %s59 = int_to_ptr.vmem [resolvable:$true] %s58
      %64 = dma.hbm_to_vmem [thread:$0]  %s57, 256, %s59, [#allocation6], 128, 128, 8
    $region13: #{tpu_custom_call.1} parent=1 // pred_fallthru
      _
    // Predicated region
    $region14: #{tpu_custom_call.1} parent=1 // pred_check
      _
    $region15: #{tpu_custom_call.1} parent=1 // pred_check_branch
      %66 = sbr.rel (0) target = $region17
    $region16: #{tpu_custom_call.1} parent=1 // pred_region
      %67 = dma.done [#allocation3], 256
    $region17: #{tpu_custom_call.1} parent=1 // pred_fallthru
      _
    // Predicated region
    $region18: #{tpu_custom_call.1} parent=1 // pred_check
      _
    $region19: #{tpu_custom_call.1} parent=1 // pred_check_branch
      %69 = sbr.rel (0) target = $region21
    $region20: #{tpu_custom_call.1} parent=1 // pred_region
      %70 = dma.done [#allocation6], 256
    $region21: #{tpu_custom_call.1} parent=1 // pred_fallthru
      _
    // Predicated region
    $region22: #{tpu_custom_call.1} parent=1 // pred_check
      _
    $region23: #{tpu_custom_call.1} parent=1 // pred_check_branch
      %72 = sbr.rel (0) target = $region25
    $region24: #{tpu_custom_call.1} parent=1 // pred_region
      %73 = dma.done [#allocation6], 256
    $region25: #{tpu_custom_call.1} parent=1 // pred_fallthru
      _
    %s74 = sadd.s32 0, 0
    %p75 = scmp.lt.s32.totalorder %s74, 0
    %s76 = scalar_select %p75, %s74, 0
    %s77 = smul.u32 2, %s76
    %s78 = sadd.s32 0, 0
    %p79 = scmp.lt.s32.totalorder %s78, 0
    %s80 = scalar_select %p79, %s78, 0
    %s81 = smul.u32 2, %s80
    %s82 = sadd.s32 0, 0
    %p83 = scmp.lt.s32.totalorder %s82, 0
    %s84 = scalar_select %p83, %s82, 0
    %s85 = smul.u32 2, %s84
    %p86 = scmp.eq.s32.totalorder 0, 0
    // Predicated region
    $region26: #{tpu_custom_call.1} parent=1 // pred_check
      %p87 = pneg %p86
    $region27: #{tpu_custom_call.1} parent=1 // pred_check_branch
      %89 = sbr.rel (%p87) target = $region29
    $region28: #{tpu_custom_call.1} parent=1 // pred_region
      %90 = vst [vmem:[#allocation8] sm:$0x1] 0.0
    $region29: #{tpu_custom_call.1} parent=1 // pred_fallthru
      _
    %v91 = vld [vmem:[#allocation2] sm:$0xff]
    %v92 = vld [vmem:[#allocation2 + $0x8] sm:$0xff]
    %v93 = vld [vmem:[#allocation5] sm:$0xff]
    %v94 = vld [vmem:[#allocation5 + $0x8] sm:$0xff]
    %v95 = vld [vmem:[#allocation7] sm:$0xff]
    %v96 = vld [vmem:[#allocation7 + $0x8] sm:$0xff]
    %v97 = vand.u32 2147483647, %v91
    %v98 = vand.u32 2147483647, %v92
    %v99 = vsub.f32 0.0, %v97
    %v100 = vsub.f32 0.0, %v98
    %v101 = vmul.f32 %v99, 1.442695
    %v102 = vpow.pop %v101
    %v103 = vmul.f32 %v100, 1.442695
    %v104 = vpow.pop %v103
    %v105 = vadd.f32 %v102, 1.0
    %v106 = vadd.f32 %v104, 1.0
    %v107 = vrcp.pop %v105
    %v108 = vrcp.pop %v106
    %vm109 = vcmp.ge.f32.partialorder %v91, 0.0
    %vm110 = vcmp.ge.f32.partialorder %v92, 0.0
    %v111 = vmul.f32 %v102, %v107
    %v112 = vmul.f32 %v104, %v108
    %v113 = vsel %vm109, %v107, %v111
    %v114 = vsel %vm110, %v108, %v112
    %v115 = vmul.f32 %v113, %v113
    %v116 = vmul.f32 %v114, %v114
    %v117 = vmul.f32 %v115, 0.75
    %v118 = vmul.f32 %v116, 0.75
    %v119 = vsub.f32 1.0, %v95
    %v120 = vsub.f32 1.0, %v96
    %v121 = vmul.f32 %v117, %v119
    %v122 = vmul.f32 %v118, %v120
    %v123 = vmul.f32 %v93, %v95
    %v124 = vmul.f32 %v94, %v96
    %v125 = vadd.f32 %v121, %v123
    %v126 = vadd.f32 %v122, %v124
    %v127 = vmax.f32 %v91, 0.0
    %v128 = vmax.f32 %v92, 0.0
    %v129 = vmul.f32 %v91, %v93
    %v130 = vmul.f32 %v92, %v94
    %v131 = vsub.f32 %v127, %v129
    %v132 = vsub.f32 %v128, %v130
    %v133 = vadd.f32 %v102, 1.0
    %v134 = vlog2.pop %v133
    %v135 = vmul.f32 %v134, 0.6931472
    %v136 = vmul.f32 -0.5, %v102
    %v137 = vadd.f32 %v136, 1.0
    %v138 = vmul.f32 %v137, %v102
    %v139 = vand.u32 2147483647, %v102
    %vm140 = vcmp.lt.f32.partialorder %v139, 0.0004427343
    %v141 = vsel %vm140, %v138, %v135
    %v142 = vadd.f32 %v104, 1.0
    %v143 = vlog2.pop %v142
    %v144 = vmul.f32 %v143, 0.6931472
    %v145 = vmul.f32 -0.5, %v104
    %v146 = vadd.f32 %v145, 1.0
    %v147 = vmul.f32 %v146, %v104
    %v148 = vand.u32 2147483647, %v104
    %vm149 = vcmp.lt.f32.partialorder %v148, 0.0004427343
    %v150 = vsel %vm149, %v147, %v144
    %v151 = vadd.f32 %v131, %v141
    %v152 = vadd.f32 %v132, %v150
    %v153 = vmul.f32 %v151, %v125
    %v154 = vmul.f32 %v152, %v126
    %v155 = vadd.f32 %v153, %v154
    %v156 = vrot.slane %v155, 4
    %v157 = vadd.f32 %v155, %v156
    %v158 = vrot.slane %v157, 2
    %v159 = vadd.f32 %v157, %v158
    %v160 = vrot.slane %v159, 1
    %v161 = vadd.f32 %v159, %v160
    %v162 = vld [vmem:[#allocation8] sm:$0x1]
    %v163 = vadd.f32 %v162, %v161
    %164 = vst [vmem:[#allocation8] sm:$0x1] %v163
    // Predicated region
    $region30: #{tpu_custom_call.1} parent=1 // pred_check
      _
    $region31: #{tpu_custom_call.1} parent=1 // pred_check_branch
      %166 = sbr.rel (0) target = $region33
    $region32: #{tpu_custom_call.1} parent=1 // pred_region
      %s168 = ssub.s32 16, 16
      %169 = vsyncadd [#allocation4], %s168
      %s171 = sshll.u32 [#allocation8], 4
      %s172 = int_to_ptr.vmem [resolvable:$true] %s171
      %174 = dma.vmem_to_hbm [thread:$0]  %s172, 16, %s3, [#allocation4]
    $region33: #{tpu_custom_call.1} parent=1 // pred_fallthru
      _
    // Predicated region
    $region34: #{tpu_custom_call.1} parent=1 // pred_check
      _
    $region35: #{tpu_custom_call.1} parent=1 // pred_check_branch
      %176 = sbr.rel (0) target = $region37
    $region36: #{tpu_custom_call.1} parent=1 // pred_region
      %177 = dma.done [#allocation4], 16
    $region37: #{tpu_custom_call.1} parent=1 // pred_fallthru
      _
    %178 = vsyncpa [#allocation3], 1
    %179 = vsyncpa [#allocation6], 1
    %180 = vsyncpa [#allocation4], 1

</llo_original>
